<compile_context>
chip_gen: v5e
topology: v5e:2x2
jax: 0.10.0
libtpu: 0.0.40
codegen_flags: <defaults>
</compile_context>

<pallas_src>
import jax
import jax.numpy as jnp
from jax.experimental import pallas as pl
from jax.experimental.pallas import tpu as pltpu

BATCH_SIZE = 32          # hardcoded in the PyTorch module's forward()
IN_FEATURES = 28 * 28    # 784
OUT_FEATURES = 1


def _discriminator_kernel(x_ref, w_ref, b_ref, o_ref):
    # x_ref: (B, 784) VMEM, w_ref: (1, 784) VMEM (lane-dense),
    # b_ref: (1,) SMEM, o_ref: (B, 1) VMEM.
    x = x_ref[...]                       # (B, 784) f32, ~28 vregs
    w = w_ref[...]                       # (1, 784) f32, broadcasts over batch
    bias = b_ref[0]                      # scalar read from SMEM (cheap sld)

    # Dot product as VPU elementwise multiply + XLU cross-lane reduction;
    # both units' slots are free next to each other in the bundle.
    logits = jnp.sum(x * w, axis=-1, keepdims=True) + bias   # (B, 1) f32

    # sigmoid(z) = 0.5 * tanh(0.5*z) + 0.5  -> single EUP op, numerically
    # exact-sigmoid-equivalent (no inf intermediate, no approx reciprocal).
    o_ref[...] = (0.5 * jnp.tanh(0.5 * logits) + 0.5).astype(o_ref.dtype)


def discriminator_forward(img, weight, bias):
    """img: (B, C, H, W) float32 NCHW; weight: (1, 784); bias: (1,)."""
    b = img.shape[0]
    assert b == BATCH_SIZE, "module hardcodes batch_size in forward()"
    x = img.reshape(BATCH_SIZE, -1).astype(jnp.float32)      # (32, 784) glue reshape
    w_row = weight.reshape(OUT_FEATURES, IN_FEATURES)        # (1, 784), NO transpose
    b_s = bias.reshape(OUT_FEATURES)                         # (1,) scalar for SMEM

    bytes_accessed = (
        BATCH_SIZE * IN_FEATURES * 4        # x in
        + IN_FEATURES * 4                   # weight row in
        + 4                                 # bias in
        + BATCH_SIZE * OUT_FEATURES * 4     # output
    )

    return pl.pallas_call(
        _discriminator_kernel,
        out_shape=jax.ShapeDtypeStruct((BATCH_SIZE, OUT_FEATURES), jnp.float32),
        in_specs=[
            pl.BlockSpec(memory_space=pltpu.MemorySpace.VMEM),   # x
            pl.BlockSpec(memory_space=pltpu.MemorySpace.VMEM),   # weight row
            pl.BlockSpec(memory_space=pltpu.MemorySpace.SMEM),   # bias scalar
        ],
        out_specs=pl.BlockSpec(memory_space=pltpu.MemorySpace.VMEM),
        cost_estimate=pl.CostEstimate(
            flops=2 * BATCH_SIZE * IN_FEATURES,      # 50,176 MACs' worth
            transcendentals=BATCH_SIZE,              # one tanh per row
            bytes_accessed=bytes_accessed,           # ~100 KiB
        ),
    )(x, w_row, b_s)


if __name__ == "__main__":
    key = jax.random.PRNGKey(0)
    k_img, k_w, k_b = jax.random.split(key, 3)

    # MNIST-like input, NCHW: (32, 1, 28, 28)
    img = jax.random.normal(k_img, (BATCH_SIZE, 1, 28, 28), dtype=jnp.float32)

    # Deterministic parameter init matching nn.Linear(784, 1) shapes:
    #   weight: (out_features, in_features) = (1, 784), bias: (1,)
    bound = 1.0 / (IN_FEATURES ** 0.5)
    weight = jax.random.uniform(
        k_w, (OUT_FEATURES, IN_FEATURES), jnp.float32, -bound, bound)
    bias = jax.random.uniform(
        k_b, (OUT_FEATURES,), jnp.float32, -bound, bound)

    out = discriminator_forward(img, weight, bias)
    out = jax.block_until_ready(out)

    # Reference check in plain JAX with exact sigmoid. The tanh-based sigmoid
    # is mathematically identical, so a tight f32 tolerance holds.
    ref = jax.nn.sigmoid(img.reshape(BATCH_SIZE, -1) @ weight.T + bias)
    assert out.shape == (BATCH_SIZE, OUT_FEATURES)
    assert jnp.allclose(out, ref, atol=1e-5, rtol=1e-5)

    print("KERNEL_OK")
</pallas_src>

<mosaic_0001>
module attributes {stable_mosaic.version = 11 : i64} {
  func.func @_discriminator_kernel(%arg0: memref<32x784xf32, #tpu.memory_space<vmem>>, %arg1: memref<1x784xf32, #tpu.memory_space<vmem>>, %arg2: memref<1xf32, #tpu.memory_space<smem>>, %arg3: memref<32x1xf32, #tpu.memory_space<vmem>>) attributes {dimension_semantics = [], scalar_prefetch = 0 : i64, scratch_operands = 0 : i64, tpu.core_type = #tpu.core_type<tc>} {
    %c0 = arith.constant 0 : index
    %c0_0 = arith.constant 0 : index
    %0 = vector.load %arg0[%c0, %c0_0] : memref<32x784xf32, #tpu.memory_space<vmem>>, vector<32x784xf32>
    %c0_1 = arith.constant 0 : index
    %c0_2 = arith.constant 0 : index
    %1 = vector.load %arg1[%c0_1, %c0_2] : memref<1x784xf32, #tpu.memory_space<vmem>>, vector<1x784xf32>
    %c0_3 = arith.constant 0 : index
    %2 = memref.load %arg2[%c0_3] : memref<1xf32, #tpu.memory_space<smem>>
    %3 = vector.broadcast %1 : vector<1x784xf32> to vector<32x784xf32>
    %4 = arith.mulf %0, %3 : vector<32x784xf32>
    %cst = arith.constant dense<0.000000e+00> : vector<32xf32>
    %5 = vector.multi_reduction <add>, %4, %cst [1] : vector<32x784xf32> to vector<32xf32>
    %6 = vector.shape_cast %5 : vector<32xf32> to vector<32x1xf32>
    %7 = vector.broadcast %2 : f32 to vector<32x1xf32>
    %8 = arith.addf %6, %7 : vector<32x1xf32>
    %cst_4 = arith.constant 5.000000e-01 : f32
    %9 = vector.broadcast %cst_4 : f32 to vector<32x1xf32>
    %10 = arith.mulf %9, %8 : vector<32x1xf32>
    %11 = math.tanh %10 : vector<32x1xf32>
    %cst_5 = arith.constant 5.000000e-01 : f32
    %12 = vector.broadcast %cst_5 : f32 to vector<32x1xf32>
    %13 = arith.mulf %12, %11 : vector<32x1xf32>
    %cst_6 = arith.constant 5.000000e-01 : f32
    %14 = vector.broadcast %cst_6 : f32 to vector<32x1xf32>
    %15 = arith.addf %13, %14 : vector<32x1xf32>
    %c0_7 = arith.constant 0 : index
    %c0_8 = arith.constant 0 : index
    %16 = vector.load %arg3[%c0_7, %c0_8] : memref<32x1xf32, #tpu.memory_space<vmem>>, vector<32x1xf32>
    tpu.vector_store %arg3[%c0_7, %c0_8], %15 {strides = array<i32>} : memref<32x1xf32, #tpu.memory_space<vmem>>, vector<32x1xf32>,
    return
  }
}

</mosaic_0001>

<llo_original>
// kernel: tpu_custom_call.1
$region0: #{tpu_custom_call.1}
  #allocation0 [shape = 'u32[]', space=smem, size = 0x4, offset = 0x4, fixed_abs, tag = 'smem constant byte address 0x4 - core index']
  #allocation1 [shape = 'u32[72,128]{1,0:T(1,128)}', space=vmem, size = 0x9000, scoped, tag = 'internal scratch']
  #allocation2 [shape = 'f32[1]{0:T(128)S(6)}', space=smem, size = 0x200, scoped, tag = 'scoped memory for tpu_custom_call.1']
  %s0 = inlined_call_operand.hbm [shape: f32[32,784], index: 0, kind: input, shape index: {}]
  %s1 = inlined_call_operand.hbm [shape: f32[1,784], index: 1, kind: input, shape index: {}]
  %s2 = inlined_call_operand.<no memory space> [shape: f32[1], index: 2, kind: input, shape index: {}]
  %s3 = inlined_call_operand.vmem [shape: f32[32,1], index: 3, kind: output, shape index: {}]
  %s4 = sld [smem:[#allocation0]]
  $region30: #{tpu_custom_call.1} parent=0
    _
  %s6 = ssub.s32 1, %s4
  %s7 = scalar_select 0, %s6, %s4
  %8 = sst [smem:[#allocation2]] %s2
  $region1: #{tpu_custom_call.1} parent=0
    #allocation3 [shape = 'u8[114688]{0}', space=vmem, size = 0x1c000, scoped, tag = 'input window, operand 0, single buffered']
    #allocation4 [shape = 's32[1]{0}', space=sflag, size = 0x4, scoped, tag = 'scoped memory for tpu_custom_call.1']
    #allocation5 [shape = 'u8[3584]{0}', space=vmem, size = 0x1000, scoped, tag = 'input window, operand 1, single buffered']
    #allocation6 [shape = 's32[1]{0}', space=sflag, size = 0x4, scoped, tag = 'scoped memory for tpu_custom_call.1']
    %9 = vsyncpa [#allocation4], 0
    %10 = vsyncpa [#allocation6], 0
    // Predicated region
    $region2: #{tpu_custom_call.1} parent=1 // pred_check
      _
    $region3: #{tpu_custom_call.1} parent=1 // pred_check_branch
      %12 = sbr.rel (0) target = $region5
    $region4: #{tpu_custom_call.1} parent=1 // pred_region
      %14 = vsyncadd [#allocation4], 0
      %s15 = sshll.u32 %s0, 4
      %s16 = int_to_ptr.hbm [resolvable:$true] %s15
      %s17 = sshll.u32 [#allocation3], 4
      %s18 = int_to_ptr.vmem [resolvable:$true] %s17
      %23 = dma.hbm_to_vmem [thread:$0]  %s16, 3584, %s18, [#allocation4], 896, 896, 56
    $region5: #{tpu_custom_call.1} parent=1 // pred_fallthru
      _
    // Predicated region
    $region6: #{tpu_custom_call.1} parent=1 // pred_check
      _
    $region7: #{tpu_custom_call.1} parent=1 // pred_check_branch
      %25 = sbr.rel (0) target = $region9
    $region8: #{tpu_custom_call.1} parent=1 // pred_region
      %27 = vsyncadd [#allocation6], 0
      %s29 = sshll.u32 %s1, 4
      %s30 = int_to_ptr.hbm [resolvable:$true] %s29
      %s31 = sshll.u32 [#allocation5], 4
      %s32 = int_to_ptr.vmem [resolvable:$true] %s31
      %34 = dma.hbm_to_vmem [thread:$0]  %s30, 112, %s32, [#allocation6]
    $region9: #{tpu_custom_call.1} parent=1 // pred_fallthru
      _
    // Predicated region
    $region10: #{tpu_custom_call.1} parent=1 // pred_check
      _
    $region11: #{tpu_custom_call.1} parent=1 // pred_check_branch
      %36 = sbr.rel (0) target = $region13
    $region12: #{tpu_custom_call.1} parent=1 // pred_region
      _
    $region13: #{tpu_custom_call.1} parent=1 // pred_fallthru
      _
    // Predicated region
    $region14: #{tpu_custom_call.1} parent=1 // pred_check
      _
    $region15: #{tpu_custom_call.1} parent=1 // pred_check_branch
      %38 = sbr.rel (0) target = $region17
    $region16: #{tpu_custom_call.1} parent=1 // pred_region
      %40 = dma.done [#allocation4], 3584
    $region17: #{tpu_custom_call.1} parent=1 // pred_fallthru
      _
    // Predicated region
    $region18: #{tpu_custom_call.1} parent=1 // pred_check
      _
    $region19: #{tpu_custom_call.1} parent=1 // pred_check_branch
      %42 = sbr.rel (0) target = $region21
    $region20: #{tpu_custom_call.1} parent=1 // pred_region
      %44 = dma.done [#allocation6], 112
    $region21: #{tpu_custom_call.1} parent=1 // pred_fallthru
      _
    %v45 = vld [vmem:[#allocation3] sm:$0xff]
    %v46 = vld [vmem:[#allocation3 + $0x8] sm:$0xff]
    %v47 = vld [vmem:[#allocation3 + $0x10] sm:$0xff]
    %v48 = vld [vmem:[#allocation3 + $0x18] sm:$0xff]
    %v49 = vld [vmem:[#allocation3 + $0x20] sm:$0xff]
    %v50 = vld [vmem:[#allocation3 + $0x28] sm:$0xff]
    %v51 = vld [vmem:[#allocation3 + $0x30] sm:$0xff]
    %v52 = vld [vmem:[#allocation3 + $0x38] sm:$0xff]
    %v53 = vld [vmem:[#allocation3 + $0x40] sm:$0xff]
    %v54 = vld [vmem:[#allocation3 + $0x48] sm:$0xff]
    %v55 = vld [vmem:[#allocation3 + $0x50] sm:$0xff]
    %v56 = vld [vmem:[#allocation3 + $0x58] sm:$0xff]
    %v57 = vld [vmem:[#allocation3 + $0x60] sm:$0xff]
    %v58 = vld [vmem:[#allocation3 + $0x68] sm:$0xff]
    %v59 = vld [vmem:[#allocation3 + $0x70] sm:$0xff]
    %v60 = vld [vmem:[#allocation3 + $0x78] sm:$0xff]
    %v61 = vld [vmem:[#allocation3 + $0x80] sm:$0xff]
    %v62 = vld [vmem:[#allocation3 + $0x88] sm:$0xff]
    %v63 = vld [vmem:[#allocation3 + $0x90] sm:$0xff]
    %v64 = vld [vmem:[#allocation3 + $0x98] sm:$0xff]
    %v65 = vld [vmem:[#allocation3 + $0xa0] sm:$0xff]
    %v66 = vld [vmem:[#allocation3 + $0xa8] sm:$0xff]
    %v67 = vld [vmem:[#allocation3 + $0xb0] sm:$0xff]
    %v68 = vld [vmem:[#allocation3 + $0xb8] sm:$0xff]
    %v69 = vld [vmem:[#allocation3 + $0xc0] sm:$0xff]
    %v70 = vld [vmem:[#allocation3 + $0xc8] sm:$0xff]
    %v71 = vld [vmem:[#allocation3 + $0xd0] sm:$0xff]
    %v72 = vld [vmem:[#allocation3 + $0xd8] sm:$0xff]
    %v73 = vld [vmem:[#allocation5] sm:$0x7f]
    %s74 = sld [smem:[#allocation2]]
    %v76 = vperm.slane %v73, 0
    %v77 = vperm.slane %v73, 1
    %v78 = vperm.slane %v73, 2
    %v79 = vperm.slane %v73, 3
    %v80 = vperm.slane %v73, 4
    %v81 = vperm.slane %v73, 5
    %v82 = vperm.slane %v73, 6
    %v90 = vmul.f32 %v45, %v76
    %v91 = vmul.f32 %v46, %v77
    %v92 = vmul.f32 %v47, %v78
    %v93 = vmul.f32 %v48, %v79
    %v94 = vmul.f32 %v49, %v80
    %v95 = vmul.f32 %v50, %v81
    %v96 = vmul.f32 %v51, %v82
    %v97 = vmul.f32 %v52, %v76
    %v98 = vmul.f32 %v53, %v77
    %v99 = vmul.f32 %v54, %v78
    %v100 = vmul.f32 %v55, %v79
    %v101 = vmul.f32 %v56, %v80
    %v102 = vmul.f32 %v57, %v81
    %v103 = vmul.f32 %v58, %v82
    %v104 = vmul.f32 %v59, %v76
    %v105 = vmul.f32 %v60, %v77
    %v106 = vmul.f32 %v61, %v78
    %v107 = vmul.f32 %v62, %v79
    %v108 = vmul.f32 %v63, %v80
    %v109 = vmul.f32 %v64, %v81
    %v110 = vmul.f32 %v65, %v82
    %v111 = vmul.f32 %v66, %v76
    %v112 = vmul.f32 %v67, %v77
    %v113 = vmul.f32 %v68, %v78
    %v114 = vmul.f32 %v69, %v79
    %v115 = vmul.f32 %v70, %v80
    %v116 = vmul.f32 %v71, %v81
    %v117 = vmul.f32 %v72, %v82
    %v118 = vadd.f32 %v90, %v91
    %v119 = vadd.f32 %v118, %v92
    %v120 = vadd.f32 %v119, %v93
    %v121 = vadd.f32 %v120, %v94
    %v122 = vadd.f32 %v121, %v95
    %vm123 = vcmask 130048
    %v124 = vsel %vm123, %v96, 0.0
    %v125 = vadd.f32 %v122, %v124
    %126 = vadd.xlane.f32.xlu0 %v125
    %v127 = vpop.xlane.xlu0 %126
    %v128 = vadd.f32 %v97, %v98
    %v129 = vadd.f32 %v128, %v99
    %v130 = vadd.f32 %v129, %v100
    %v131 = vadd.f32 %v130, %v101
    %v132 = vadd.f32 %v131, %v102
    %v133 = vsel %vm123, %v103, 0.0
    %v134 = vadd.f32 %v132, %v133
    %135 = vadd.xlane.f32.xlu0 %v134
    %v136 = vpop.xlane.xlu0 %135
    %v137 = vadd.f32 %v104, %v105
    %v138 = vadd.f32 %v137, %v106
    %v139 = vadd.f32 %v138, %v107
    %v140 = vadd.f32 %v139, %v108
    %v141 = vadd.f32 %v140, %v109
    %v142 = vsel %vm123, %v110, 0.0
    %v143 = vadd.f32 %v141, %v142
    %144 = vadd.xlane.f32.xlu0 %v143
    %v145 = vpop.xlane.xlu0 %144
    %v146 = vadd.f32 %v111, %v112
    %v147 = vadd.f32 %v146, %v113
    %v148 = vadd.f32 %v147, %v114
    %v149 = vadd.f32 %v148, %v115
    %v150 = vadd.f32 %v149, %v116
    %v151 = vsel %vm123, %v117, 0.0
    %v152 = vadd.f32 %v150, %v151
    %153 = vadd.xlane.f32.xlu0 %v152
    %v154 = vpop.xlane.xlu0 %153
    %v155 = vstv %s74
    %v156 = vadd.f32 %v127, %v155
    %v157 = vadd.f32 %v136, %v155
    %v158 = vadd.f32 %v145, %v155
    %v159 = vadd.f32 %v154, %v155
    %v160 = vmul.f32 %v156, 0.5
    %v161 = vmul.f32 %v157, 0.5
    %v162 = vmul.f32 %v158, 0.5
    %v163 = vmul.f32 %v159, 0.5
    %v164 = vtanh.pop %v160
    %v165 = vtanh.pop %v161
    %v166 = vtanh.pop %v162
    %v167 = vtanh.pop %v163
    %v168 = vmul.f32 %v164, 0.5
    %v169 = vmul.f32 %v165, 0.5
    %v170 = vmul.f32 %v166, 0.5
    %v171 = vmul.f32 %v167, 0.5
    %v172 = vadd.f32 %v168, 0.5
    %v173 = vadd.f32 %v169, 0.5
    %v174 = vadd.f32 %v170, 0.5
    %v175 = vadd.f32 %v171, 0.5
    %vm176 = vcmask 7168
    %177 = vst.msk [vmem:[%s3] sm:$0xff] %vm176, %v172
    %178 = vst.msk [vmem:[%s3 + $0x8] sm:$0xff] %vm176, %v173
    %179 = vst.msk [vmem:[%s3 + $0x10] sm:$0xff] %vm176, %v174
    %180 = vst.msk [vmem:[%s3 + $0x18] sm:$0xff] %vm176, %v175
    // Predicated region
    $region22: #{tpu_custom_call.1} parent=1 // pred_check
      _
    $region23: #{tpu_custom_call.1} parent=1 // pred_check_branch
      %182 = sbr.rel (0) target = $region25
    $region24: #{tpu_custom_call.1} parent=1 // pred_region
      _
    $region25: #{tpu_custom_call.1} parent=1 // pred_fallthru
      _
    // Predicated region
    $region26: #{tpu_custom_call.1} parent=1 // pred_check
      _
    $region27: #{tpu_custom_call.1} parent=1 // pred_check_branch
      %184 = sbr.rel (0) target = $region29
    $region28: #{tpu_custom_call.1} parent=1 // pred_region
      _
    $region29: #{tpu_custom_call.1} parent=1 // pred_fallthru
      _
    %185 = vsyncpa [#allocation4], 1
    %186 = vsyncpa [#allocation6], 1

</llo_original>
